<compile_context>
chip_gen: v5e
topology: v5e:2x2
jax: 0.10.0
libtpu: 0.0.40
codegen_flags: <defaults>
</compile_context>

<pallas_src>
import math
import functools

import jax
import jax.numpy as jnp
from jax.experimental import pallas as pl
from jax.experimental.pallas import tpu as pltpu

# ----------------------------------------------------------------------------
# Pallas matmul kernel (the compute hot path for every non-tiny conv)
# ----------------------------------------------------------------------------
BM = 256            # M tile: multiple of 16 (bf16 sublanes); grid>=2 for M>=512
BN_MAX = 1024       # N kept as a full-dim block up to this size, else tiled
BK_MAX = 1024       # K kept as a full-dim block up to this size, else tiled
PALLAS_MIN_M = 128  # below these, route through a fused XLA dot instead
PALLAS_MIN_N = 32   # (sub-32-lane outputs are store-masked and MXU-starved)


def _round_up(x, m):
    return ((x + m - 1) // m) * m


def _pick_k_block(K):
    """Returns (bk, k_pad).  bk is either the full K (legal block for any K)
    or a multiple of 128; zero-padding the reduction axis is the fallback."""
    if K <= BK_MAX:
        return K, 0
    for bk in range(BK_MAX, 127, -128):      # largest mult-of-128 divisor of K
        if K % bk == 0:
            return bk, 0
    bk = 512
    return bk, _round_up(K, bk) - K          # zero-pad K (correct for the sum)


def _mm_kernel_single_k(act, a_ref, b_ref, bias_ref, o_ref):
    acc = jnp.dot(a_ref[...], b_ref[...], preferred_element_type=jnp.float32)
    acc = acc + bias_ref[...]                # (1, bn) broadcast over rows
    if act == "relu":
        acc = jnp.maximum(acc, 0.0)
    o_ref[...] = acc.astype(o_ref.dtype)


def _mm_kernel_multi_k(act, a_ref, b_ref, bias_ref, o_ref, acc_ref):
    @pl.when(pl.program_id(2) == 0)
    def _():
        acc_ref[...] = jnp.zeros_like(acc_ref)

    acc_ref[...] += jnp.dot(a_ref[...], b_ref[...],
                            preferred_element_type=jnp.float32)

    @pl.when(pl.program_id(2) == pl.num_programs(2) - 1)
    def _():
        acc = acc_ref[...] + bias_ref[...]
        if act == "relu":
            acc = jnp.maximum(acc, 0.0)
        o_ref[...] = acc.astype(o_ref.dtype)


def pallas_matmul(a, b, bias=None, act=None, out_dtype=jnp.bfloat16):
    """a: [M, K], b: [K, N] -> out_dtype [M, N].

    bf16 MXU inputs, f32 accumulation, fused bias + ReLU epilogue, bf16
    writeback.  M is tiled (ragged last block masked by Pallas, no host-side
    pad/slice); K gets a reduction grid axis + VMEM accumulator when large;
    N is tiled only when > BN_MAX.
    """
    M, K = a.shape
    K2, N = b.shape
    assert K == K2

    a = a.astype(jnp.bfloat16)
    b = b.astype(jnp.bfloat16)
    bias_row = (jnp.zeros((N,), jnp.float32) if bias is None
                else bias.astype(jnp.float32)).reshape(1, N)

    bm = min(BM, _round_up(M, 16))
    bn = N if N <= BN_MAX else BN_MAX
    bk, k_pad = _pick_k_block(K)
    if k_pad:
        a = jnp.pad(a, ((0, 0), (0, k_pad)))
        b = jnp.pad(b, ((0, k_pad), (0, 0)))
    Kp = K + k_pad

    grid_m = pl.cdiv(M, bm)
    grid_n = pl.cdiv(N, bn)
    grid_k = Kp // bk

    if grid_k == 1:
        kernel = functools.partial(_mm_kernel_single_k, act)
        grid = (grid_m, grid_n)
        in_specs = [pl.BlockSpec((bm, bk), lambda i, j: (i, 0)),
                    pl.BlockSpec((bk, bn), lambda i, j: (0, j)),
                    pl.BlockSpec((1, bn), lambda i, j: (0, j))]
        out_specs = pl.BlockSpec((bm, bn), lambda i, j: (i, j))
        scratch = ()
        sem = ("parallel", "parallel")
    else:
        kernel = functools.partial(_mm_kernel_multi_k, act)
        grid = (grid_m, grid_n, grid_k)
        in_specs = [pl.BlockSpec((bm, bk), lambda i, j, k: (i, k)),
                    pl.BlockSpec((bk, bn), lambda i, j, k: (k, j)),
                    pl.BlockSpec((1, bn), lambda i, j, k: (0, j))]
        out_specs = pl.BlockSpec((bm, bn), lambda i, j, k: (i, j))
        scratch = (pltpu.VMEM((bm, bn), jnp.float32),)
        sem = ("parallel", "parallel", "arbitrary")

    return pl.pallas_call(
        kernel,
        out_shape=jax.ShapeDtypeStruct((M, N), out_dtype),
        grid_spec=pltpu.PrefetchScalarGridSpec(
            num_scalar_prefetch=0,
            grid=grid,
            in_specs=in_specs,
            out_specs=out_specs,
            scratch_shapes=scratch),
        compiler_params=pltpu.CompilerParams(dimension_semantics=sem),
    )(a, b, bias_row)


def matmul(a, b, bias=None, act=None, out_dtype=jnp.bfloat16):
    """Dispatcher: Pallas for lane/row-dense matmuls, fused XLA dot for tiny
    lane-sparse ones (masked partial stores + >90% idle MXU columns)."""
    M, K = a.shape
    N = b.shape[1]
    if M >= PALLAS_MIN_M and N >= PALLAS_MIN_N:
        return pallas_matmul(a, b, bias=bias, act=act, out_dtype=out_dtype)
    out = jnp.dot(a.astype(jnp.bfloat16), b.astype(jnp.bfloat16),
                  preferred_element_type=jnp.float32)
    if bias is not None:
        out = out + bias.astype(jnp.float32)
    if act == "relu":
        out = jnp.maximum(out, 0.0)
    return out.astype(out_dtype)


# ----------------------------------------------------------------------------
# Conv2d (NHWC) = im2col (glue, no transposes) + matmul (compute)
# ----------------------------------------------------------------------------
def conv2d(x, w, b=None, stride=1, dilation=1, padding=0, act=None):
    """x: [N, H, W, Cin] NHWC; w: [kh, kw, Cin, Cout] (HWIO, pre-cast bf16)."""
    N, H, W, Cin = x.shape
    kh, kw, Cin2, Cout = w.shape
    assert Cin == Cin2
    x = x.astype(jnp.bfloat16)
    xp = jnp.pad(x, ((0, 0), (padding, padding), (padding, padding), (0, 0)))
    Hp, Wp = xp.shape[1], xp.shape[2]
    Ho = (Hp - dilation * (kh - 1) - 1) // stride + 1
    Wo = (Wp - dilation * (kw - 1) - 1) // stride + 1

    if kh == 1 and kw == 1 and stride == 1:
        A = xp.reshape(N * Ho * Wo, Cin)
    else:
        # TODO(synk): fold the kh*kw taps into the Pallas K reduction
        # (shifted-window index_map over the padded NHWC input) so im2col is
        # never materialized in HBM at realistic spatial sizes.
        cols = []
        for i in range(kh):
            for j in range(kw):
                r0, c0 = i * dilation, j * dilation
                patch = xp[:,
                           r0:r0 + stride * (Ho - 1) + 1:stride,
                           c0:c0 + stride * (Wo - 1) + 1:stride, :]
                cols.append(patch)                       # [N, Ho, Wo, Cin]
        cols = jnp.stack(cols, axis=3)                   # [N, Ho, Wo, kh*kw, Cin]
        A = cols.reshape(N * Ho * Wo, kh * kw * Cin)

    Bm = w.reshape(kh * kw * Cin, Cout)                  # free reshape (HWIO)
    out = matmul(A, Bm, bias=b, act=act)                 # bf16 [N*Ho*Wo, Cout]
    return out.reshape(N, Ho, Wo, Cout)


# ----------------------------------------------------------------------------
# Index-rearrangement glue (NHWC, no compute)
# ----------------------------------------------------------------------------
def pixel_shuffle(x, r):
    N, H, W, C = x.shape
    Co = C // (r * r)
    x = x.reshape(N, H, W, Co, r, r)
    x = x.transpose(0, 1, 4, 2, 5, 3)
    return x.reshape(N, H * r, W * r, Co)


def sai2macpi(x, angRes):
    b, hu, wv, c = x.shape
    h, w = hu // angRes, wv // angRes
    x = x.reshape(b, angRes, h, angRes, w, c)
    x = x.transpose(0, 2, 1, 4, 3, 5)
    return x.reshape(b, h * angRes, w * angRes, c)


def macpi2sai(x, angRes):
    b, H, W, c = x.shape
    h, w = H // angRes, W // angRes
    x = x.reshape(b, h, angRes, w, angRes, c)
    x = x.transpose(0, 2, 1, 4, 3, 5)
    return x.reshape(b, angRes * h, angRes * w, c)


def macpi2epi(x, angRes):
    c = angRes // 2
    d0 = jnp.concatenate([x[:, c::angRes, i::angRes, :] for i in range(angRes)], axis=3)
    d90 = jnp.concatenate([x[:, i::angRes, c::angRes, :] for i in range(angRes)], axis=3)
    d45 = jnp.concatenate([x[:, i::angRes, i::angRes, :] for i in range(angRes)], axis=3)
    d135 = jnp.concatenate(
        [x[:, i::angRes, angRes - i - 1::angRes, :] for i in range(angRes)], axis=3)
    return d0, d90, d45, d135


# ----------------------------------------------------------------------------
# Bicubic upsample matching PyTorch F.interpolate(mode='bicubic',
# align_corners=False), a=-0.75, clamped border taps — as two dense
# interpolation matmuls (no TPU gathers).
# ----------------------------------------------------------------------------
def _cubic_kernel(t, a=-0.75):
    at = jnp.abs(t)
    at2, at3 = at * at, at * at * at
    w1 = (a + 2.0) * at3 - (a + 3.0) * at2 + 1.0
    w2 = a * at3 - 5.0 * a * at2 + 8.0 * a * at - 4.0 * a
    return jnp.where(at <= 1.0, w1, jnp.where(at < 2.0, w2, 0.0))


def _interp_matrix(in_size, out_size):
    dst = jnp.arange(out_size, dtype=jnp.float32)
    src = (dst + 0.5) * (in_size / out_size) - 0.5
    fl = jnp.floor(src)
    frac = src - fl
    idx = fl.astype(jnp.int32)
    taps = jnp.clip(idx[:, None] + jnp.arange(-1, 3)[None, :], 0, in_size - 1)
    dist = frac[:, None] - jnp.arange(-1, 3, dtype=jnp.float32)[None, :]
    wts = _cubic_kernel(dist)                                  # [out, 4]
    onehot = jax.nn.one_hot(taps, in_size, dtype=jnp.float32)  # [out, 4, in]
    return jnp.sum(onehot * wts[:, :, None], axis=1)           # [out, in]


def upsample_bicubic(x, scale):
    N, C, H, W = x.shape
    Mh = _interp_matrix(H, H * scale)                          # [Ho, H]
    Mw = _interp_matrix(W, W * scale)                          # [Wo, W]
    return jnp.einsum('ph,nchw,qw->ncpq', Mh, x.astype(jnp.float32), Mw)


# ----------------------------------------------------------------------------
# Parameter construction (deterministic, synthetic; weights stored HWIO bf16)
# ----------------------------------------------------------------------------
class KeyGen:
    def __init__(self, seed=0):
        self.key = jax.random.PRNGKey(seed)

    def __call__(self):
        self.key, k = jax.random.split(self.key)
        return k


def conv_params(kg, cout, cin, kh, kw, bias=False):
    fan_in = cin * kh * kw
    w = (jax.random.normal(kg(), (kh, kw, cin, cout), jnp.float32)
         * (1.0 / math.sqrt(fan_in))).astype(jnp.bfloat16)
    p = {"w": w}
    if bias:
        p["b"] = 0.01 * jax.random.normal(kg(), (cout,), jnp.float32)
    return p


def calayer_params(kg, c, reduction):
    return {"conv1": conv_params(kg, c // reduction, c, 1, 1, bias=True),
            "conv2": conv_params(kg, c, c // reduction, 1, 1, bias=True)}


def resblock_params(kg, nf):
    return {"conv1": conv_params(kg, nf, nf, 3, 3, bias=True),
            "conv2": conv_params(kg, nf, nf, 3, 3, bias=True),
            "ca": calayer_params(kg, nf, int(nf // 4))}


def resgroup_params(kg, n_blocks, nf):
    return {"blocks": [resblock_params(kg, nf) for _ in range(n_blocks)],
            "conv": conv_params(kg, nf, nf, 3, 3, bias=True)}


def attention_fusion_params(kg, channels):
    return {"alpha": 1.0 + 0.1 * jax.random.normal(kg(), (1,), jnp.float32),
            "gamma": 0.1 * jax.random.normal(kg(), (1,), jnp.float32),
            "beta": 0.1 * jax.random.normal(kg(), (1,), jnp.float32),
            "conv": conv_params(kg, channels, 5 * channels, 1, 1, bias=False)}


def hfem_params(kg, angRes, n_blocks, channels):
    a2c = angRes * angRes * channels
    return {
        "head_epi": conv_params(kg, channels, angRes * channels, 3, 3),
        "epi2spa": conv_params(kg, a2c, 4 * channels, 1, 1),
        "head_spa_intra": conv_params(kg, channels, channels, 3, 3),
        "head_spa_inter": conv_params(kg, channels, channels, 3, 3),
        "head_ang_intra": conv_params(kg, channels, channels, angRes, angRes),
        "ang2spa_intra": conv_params(kg, a2c, channels, 1, 1),
        "head_ang_inter": conv_params(kg, channels, channels, 2 * angRes, 2 * angRes),
        "ang2spa_inter": conv_params(kg, 4 * a2c, channels, 1, 1),
        "AFM": attention_fusion_params(kg, channels),
        "SRG": resgroup_params(kg, n_blocks, channels),
    }


def model_params(kg, angRes, n_groups, n_blocks, channels, scale):
    p = {"head": conv_params(kg, channels, 1, 3, 3),
         "body_hfems": [hfem_params(kg, angRes, n_blocks, channels)
                        for _ in range(n_groups)],
         "body_conv": conv_params(kg, channels, channels, 3, 3)}
    up = []
    if (scale & (scale - 1)) == 0:
        for _ in range(int(math.log2(scale))):
            up.append(conv_params(kg, 4 * channels, channels, 3, 3, bias=True))
    elif scale == 3:
        up.append(conv_params(kg, 9 * channels, channels, 3, 3, bias=True))
    else:
        raise NotImplementedError
    p["tail_up"] = up
    p["tail_conv"] = conv_params(kg, 1, channels, 1, 1, bias=True)
    return p


# ----------------------------------------------------------------------------
# Module forwards (NHWC activations, bf16)
# ----------------------------------------------------------------------------
def calayer_forward(p, x):
    # Tiny (N, C) matmuls on the 1x1 pooled map -> plain XLA, no pallas_call.
    y = jnp.mean(x.astype(jnp.float32), axis=(1, 2))                     # [N, C]
    w1 = p["conv1"]["w"].reshape(-1, p["conv1"]["w"].shape[-1]).astype(jnp.float32)
    w2 = p["conv2"]["w"].reshape(-1, p["conv2"]["w"].shape[-1]).astype(jnp.float32)
    y = jnp.maximum(y @ w1 + p["conv1"]["b"], 0.0)
    y = jax.nn.sigmoid(y @ w2 + p["conv2"]["b"])
    return x * y[:, None, None, :].astype(x.dtype)


def resblock_forward(p, x, dilation, padding):
    out = conv2d(x, p["conv1"]["w"], p["conv1"]["b"],
                 dilation=dilation, padding=padding, act="relu")   # fused ReLU
    out = conv2d(out, p["conv2"]["w"], p["conv2"]["b"],
                 dilation=dilation, padding=padding)
    out = calayer_forward(p["ca"], out)
    return x + out


def resgroup_forward(p, x, dilation, padding):
    res = x
    for bp in p["blocks"]:
        res = resblock_forward(bp, res, dilation, padding)
    res = conv2d(res, p["conv"]["w"], p["conv"]["b"],
                 dilation=dilation, padding=padding)
    return res + x


def attention_fusion_forward(p, x, eps=1e-5):
    # x: [b, 5, H, W, C].  Covariance (5xM @ Mx5) and the 5x5 bmm are tiny ->
    # batched einsum in XLA (f32) instead of per-batch pallas_calls.
    b, N5, H, W, C = x.shape
    M = C * H * W
    xr = x.astype(jnp.float32).reshape(b, N5, M)
    mean = jnp.mean(xr, axis=-1, keepdims=True)
    xc = xr - mean
    cov = jnp.einsum('bnm,bkm->bnk', xc, xc) * (1.0 / (M - 1)) * p["alpha"]
    norm = cov / jnp.sqrt(jnp.mean(cov ** 2, axis=(1, 2), keepdims=True) + eps)
    attention = jnp.tanh(p["gamma"] * norm + p["beta"])
    out = jnp.einsum('bnk,bkm->bnm', attention, xr)
    out = out.reshape(b, N5, H, W, C) + xr.reshape(b, N5, H, W, C)
    out = out.transpose(0, 2, 3, 1, 4).reshape(b, H, W, N5 * C)
    return conv2d(out, p["conv"]["w"])


def hfem_forward(p, x, angRes):
    d0, d90, d45, d135 = macpi2epi(x, angRes)
    # The four EPI branches share head_epi weights and shapes: run them as one
    # batched conv (a single matmul) instead of four.
    d_all = conv2d(jnp.concatenate([d0, d90, d45, d135], axis=0),
                   p["head_epi"]["w"], padding=1)
    d0, d90, d45, d135 = jnp.split(d_all, 4, axis=0)
    mid = jnp.concatenate([d0, d90, d45, d135], axis=3)
    x_epi = pixel_shuffle(conv2d(mid, p["epi2spa"]["w"]), angRes)

    x_s_intra = conv2d(x, p["head_spa_intra"]["w"], dilation=angRes, padding=angRes)
    x_s_inter = conv2d(x, p["head_spa_inter"]["w"], padding=1)
    x_a_intra = conv2d(x, p["head_ang_intra"]["w"], stride=angRes)
    x_a_intra = pixel_shuffle(conv2d(x_a_intra, p["ang2spa_intra"]["w"]), angRes)
    x_a_inter = conv2d(x, p["head_ang_inter"]["w"], stride=2 * angRes)
    x_a_inter = pixel_shuffle(conv2d(x_a_inter, p["ang2spa_inter"]["w"]), 2 * angRes)

    out = jnp.stack([x_epi, x_a_inter, x_a_intra, x_s_inter, x_s_intra], axis=1)
    out = attention_fusion_forward(p["AFM"], out)
    out = resgroup_forward(p["SRG"], out, dilation=angRes, padding=angRes)
    return out + x


def model_forward(p, x, angRes, scale):
    # x: [N, 1, H, W] (NCHW, like PyTorch)
    x_up = upsample_bicubic(x, scale)                       # NCHW, f32
    xn = jnp.transpose(x, (0, 2, 3, 1))                     # -> NHWC
    xm = sai2macpi(xn, angRes)
    xh = conv2d(xm, p["head"]["w"], dilation=angRes, padding=angRes)
    res = xh
    for hp in p["body_hfems"]:
        res = hfem_forward(hp, res, angRes)
    res = conv2d(res, p["body_conv"]["w"], padding=1)
    res = res + xh
    res = macpi2sai(res, angRes)
    # tail: Upsampler (power-of-2 or x3) + 1x1 conv
    t = res
    r = 3 if scale == 3 else 2
    for up in p["tail_up"]:
        t = conv2d(t, up["w"], up["b"], padding=1)
        t = pixel_shuffle(t, r)
    out = conv2d(t, p["tail_conv"]["w"], p["tail_conv"]["b"])
    out = jnp.transpose(out, (0, 3, 1, 2)).astype(jnp.float32)  # -> NCHW f32
    return out + x_up


# ----------------------------------------------------------------------------
if __name__ == "__main__":
    # small config (args): angRes_in=2, n_groups=1, n_blocks=1, channels=8, scale=2
    angRes, n_groups, n_blocks, channels, scale = 2, 1, 1, 8, 2
    h = w = 8                                   # per-view spatial size (even)
    H, W = angRes * h, angRes * w               # SAI size

    kg = KeyGen(0)
    params = model_params(kg, angRes, n_groups, n_blocks, channels, scale)

    x = jax.random.normal(jax.random.PRNGKey(0), (2, 1, H, W), jnp.float32)

    fwd = jax.jit(functools.partial(model_forward, angRes=angRes, scale=scale))
    y = fwd(params, x)
    jax.block_until_ready(y)
    assert y.shape == (2, 1, H * scale, W * scale)
    assert bool(jnp.all(jnp.isfinite(y)))
    print("KERNEL_OK")
</pallas_src>

<mosaic_0001>
module attributes {stable_mosaic.version = 11 : i64} {
  func.func @_mm_kernel_single_k(%arg0: i32, %arg1: i32, %arg2: memref<128x32xbf16, #tpu.memory_space<vmem>>, %arg3: memref<32x32xbf16, #tpu.memory_space<vmem>>, %arg4: memref<1x32xf32, #tpu.memory_space<vmem>>, %arg5: memref<128x32xbf16, #tpu.memory_space<vmem>>) attributes {dimension_semantics = [#tpu.dimension_semantics<parallel>, #tpu.dimension_semantics<parallel>], iteration_bounds = array<i64: 1, 1>, scalar_prefetch = 0 : i64, scratch_operands = 0 : i64, tpu.core_type = #tpu.core_type<tc>, window_params = [{transform_indices = @transform_0, window_bounds = array<i64: 128, 32>}, {transform_indices = @transform_1, window_bounds = array<i64: 32, 32>}, {transform_indices = @transform_2, window_bounds = array<i64: 1, 32>}, {transform_indices = @transform_3, window_bounds = array<i64: 128, 32>}]} {
    %c0 = arith.constant 0 : index
    %c0_0 = arith.constant 0 : index
    %0 = vector.load %arg2[%c0, %c0_0] : memref<128x32xbf16, #tpu.memory_space<vmem>>, vector<128x32xbf16>
    %c0_1 = arith.constant 0 : index
    %c0_2 = arith.constant 0 : index
    %1 = vector.load %arg3[%c0_1, %c0_2] : memref<32x32xbf16, #tpu.memory_space<vmem>>, vector<32x32xbf16>
    %cst = arith.constant dense<0.000000e+00> : vector<128x32xf32>
    %2 = tpu.matmul %0, %1, %cst {dimension_numbers = #tpu.dot_dimension_numbers<[1], [0], [0], [1], [0, 0, 1, 1], [], []>} : vector<128x32xbf16>, vector<32x32xbf16>, vector<128x32xf32> -> vector<128x32xf32>
    %c0_3 = arith.constant 0 : index
    %c0_4 = arith.constant 0 : index
    %3 = vector.load %arg4[%c0_3, %c0_4] : memref<1x32xf32, #tpu.memory_space<vmem>>, vector<1x32xf32>
    %4 = vector.broadcast %3 : vector<1x32xf32> to vector<128x32xf32>
    %5 = arith.addf %2, %4 : vector<128x32xf32>
    %6 = arith.truncf %5 : vector<128x32xf32> to vector<128x32xbf16>
    %c0_5 = arith.constant 0 : index
    %c0_6 = arith.constant 0 : index
    %7 = vector.load %arg5[%c0_5, %c0_6] : memref<128x32xbf16, #tpu.memory_space<vmem>>, vector<128x32xbf16>
    tpu.vector_store %arg5[%c0_5, %c0_6], %6 {strides = array<i32>} : memref<128x32xbf16, #tpu.memory_space<vmem>>, vector<128x32xbf16>,
    return
  }
  func.func @transform_0(%arg0: i32, %arg1: i32) -> (i32, i32) {
    %c0_i32 = arith.constant 0 : i32
    %c0_i32_0 = arith.constant 0 : i32
    return %arg0, %c0_i32 : i32, i32
  }
  func.func @transform_1(%arg0: i32, %arg1: i32) -> (i32, i32) {
    %c0_i32 = arith.constant 0 : i32
    %c0_i32_0 = arith.constant 0 : i32
    return %c0_i32, %arg1 : i32, i32
  }
  func.func @transform_2(%arg0: i32, %arg1: i32) -> (i32, i32) {
    %c0_i32 = arith.constant 0 : i32
    %c0_i32_0 = arith.constant 0 : i32
    return %c0_i32, %arg1 : i32, i32
  }
  func.func @transform_3(%arg0: i32, %arg1: i32) -> (i32, i32) {
    %c0_i32 = arith.constant 0 : i32
    return %arg0, %arg1 : i32, i32
  }
}

module attributes {stable_mosaic.version = 11 : i64} {
  func.func @_mm_kernel_single_k(%arg0: i32, %arg1: i32, %arg2: memref<128x8xbf16, #tpu.memory_space<vmem>>, %arg3: memref<8x32xbf16, #tpu.memory_space<vmem>>, %arg4: memref<1x32xf32, #tpu.memory_space<vmem>>, %arg5: memref<128x32xbf16, #tpu.memory_space<vmem>>) attributes {dimension_semantics = [#tpu.dimension_semantics<parallel>, #tpu.dimension_semantics<parallel>], iteration_bounds = array<i64: 1, 1>, scalar_prefetch = 0 : i64, scratch_operands = 0 : i64, tpu.core_type = #tpu.core_type<tc>, window_params = [{transform_indices = @transform_0, window_bounds = array<i64: 128, 8>}, {transform_indices = @transform_1, window_bounds = array<i64: 8, 32>}, {transform_indices = @transform_2, window_bounds = array<i64: 1, 32>}, {transform_indices = @transform_3, window_bounds = array<i64: 128, 32>}]} {
    %c0 = arith.constant 0 : index
    %c0_0 = arith.constant 0 : index
    %0 = vector.load %arg2[%c0, %c0_0] : memref<128x8xbf16, #tpu.memory_space<vmem>>, vector<128x8xbf16>
    %c0_1 = arith.constant 0 : index
    %c0_2 = arith.constant 0 : index
    %1 = vector.load %arg3[%c0_1, %c0_2] : memref<8x32xbf16, #tpu.memory_space<vmem>>, vector<8x32xbf16>
    %cst = arith.constant dense<0.000000e+00> : vector<128x32xf32>
    %2 = tpu.matmul %0, %1, %cst {dimension_numbers = #tpu.dot_dimension_numbers<[1], [0], [0], [1], [0, 0, 1, 1], [], []>} : vector<128x8xbf16>, vector<8x32xbf16>, vector<128x32xf32> -> vector<128x32xf32>
    %c0_3 = arith.constant 0 : index
    %c0_4 = arith.constant 0 : index
    %3 = vector.load %arg4[%c0_3, %c0_4] : memref<1x32xf32, #tpu.memory_space<vmem>>, vector<1x32xf32>
    %4 = vector.broadcast %3 : vector<1x32xf32> to vector<128x32xf32>
    %5 = arith.addf %2, %4 : vector<128x32xf32>
    %6 = arith.truncf %5 : vector<128x32xf32> to vector<128x32xbf16>
    %c0_5 = arith.constant 0 : index
    %c0_6 = arith.constant 0 : index
    %7 = vector.load %arg5[%c0_5, %c0_6] : memref<128x32xbf16, #tpu.memory_space<vmem>>, vector<128x32xbf16>
    tpu.vector_store %arg5[%c0_5, %c0_6], %6 {strides = array<i32>} : memref<128x32xbf16, #tpu.memory_space<vmem>>, vector<128x32xbf16>,
    return
  }
  func.func @transform_0(%arg0: i32, %arg1: i32) -> (i32, i32) {
    %c0_i32 = arith.constant 0 : i32
    %c0_i32_0 = arith.constant 0 : i32
    return %arg0, %c0_i32 : i32, i32
  }
  func.func @transform_1(%arg0: i32, %arg1: i32) -> (i32, i32) {
    %c0_i32 = arith.constant 0 : i32
    %c0_i32_0 = arith.constant 0 : i32
    return %c0_i32, %arg1 : i32, i32
  }
  func.func @transform_2(%arg0: i32, %arg1: i32) -> (i32, i32) {
    %c0_i32 = arith.constant 0 : i32
    %c0_i32_0 = arith.constant 0 : i32
    return %c0_i32, %arg1 : i32, i32
  }
  func.func @transform_3(%arg0: i32, %arg1: i32) -> (i32, i32) {
    %c0_i32 = arith.constant 0 : i32
    return %arg0, %arg1 : i32, i32
  }
}

module attributes {stable_mosaic.version = 11 : i64} {
  func.func @_mm_kernel_single_k(%arg0: i32, %arg1: i32, %arg2: memref<256x72xbf16, #tpu.memory_space<vmem>>, %arg3: memref<72x32xbf16, #tpu.memory_space<vmem>>, %arg4: memref<1x32xf32, #tpu.memory_space<vmem>>, %arg5: memref<256x32xbf16, #tpu.memory_space<vmem>>) attributes {dimension_semantics = [#tpu.dimension_semantics<parallel>, #tpu.dimension_semantics<parallel>], iteration_bounds = array<i64: 2, 1>, scalar_prefetch = 0 : i64, scratch_operands = 0 : i64, tpu.core_type = #tpu.core_type<tc>, window_params = [{transform_indices = @transform_0, window_bounds = array<i64: 256, 72>}, {transform_indices = @transform_1, window_bounds = array<i64: 72, 32>}, {transform_indices = @transform_2, window_bounds = array<i64: 1, 32>}, {transform_indices = @transform_3, window_bounds = array<i64: 256, 32>}]} {
    %c0 = arith.constant 0 : index
    %c0_0 = arith.constant 0 : index
    %0 = vector.load %arg2[%c0, %c0_0] : memref<256x72xbf16, #tpu.memory_space<vmem>>, vector<256x72xbf16>
    %c0_1 = arith.constant 0 : index
    %c0_2 = arith.constant 0 : index
    %1 = vector.load %arg3[%c0_1, %c0_2] : memref<72x32xbf16, #tpu.memory_space<vmem>>, vector<72x32xbf16>
    %cst = arith.constant dense<0.000000e+00> : vector<256x32xf32>
    %2 = tpu.matmul %0, %1, %cst {dimension_numbers = #tpu.dot_dimension_numbers<[1], [0], [0], [1], [0, 0, 1, 1], [], []>} : vector<256x72xbf16>, vector<72x32xbf16>, vector<256x32xf32> -> vector<256x32xf32>
    %c0_3 = arith.constant 0 : index
    %c0_4 = arith.constant 0 : index
    %3 = vector.load %arg4[%c0_3, %c0_4] : memref<1x32xf32, #tpu.memory_space<vmem>>, vector<1x32xf32>
    %4 = vector.broadcast %3 : vector<1x32xf32> to vector<256x32xf32>
    %5 = arith.addf %2, %4 : vector<256x32xf32>
    %6 = arith.truncf %5 : vector<256x32xf32> to vector<256x32xbf16>
    %c0_5 = arith.constant 0 : index
    %c0_6 = arith.constant 0 : index
    %7 = vector.load %arg5[%c0_5, %c0_6] : memref<256x32xbf16, #tpu.memory_space<vmem>>, vector<256x32xbf16>
    tpu.vector_store %arg5[%c0_5, %c0_6], %6 {strides = array<i32>} : memref<256x32xbf16, #tpu.memory_space<vmem>>, vector<256x32xbf16>,
    return
  }
  func.func @transform_0(%arg0: i32, %arg1: i32) -> (i32, i32) {
    %c0_i32 = arith.constant 0 : i32
    %c0_i32_0 = arith.constant 0 : i32
    return %arg0, %c0_i32 : i32, i32
  }
  func.func @transform_1(%arg0: i32, %arg1: i32) -> (i32, i32) {
    %c0_i32 = arith.constant 0 : i32
    %c0_i32_0 = arith.constant 0 : i32
    return %c0_i32, %arg1 : i32, i32
  }
  func.func @transform_2(%arg0: i32, %arg1: i32) -> (i32, i32) {
    %c0_i32 = arith.constant 0 : i32
    %c0_i32_0 = arith.constant 0 : i32
    return %c0_i32, %arg1 : i32, i32
  }
  func.func @transform_3(%arg0: i32, %arg1: i32) -> (i32, i32) {
    %c0_i32 = arith.constant 0 : i32
    return %arg0, %arg1 : i32, i32
  }
}

</mosaic_0001>

<llo_original>
// kernel: model_forward.3
$region0: #{model_forward.3}
  #allocation0 [shape = 'u32[]', space=smem, size = 0x4, offset = 0x4, fixed_abs, tag = 'smem constant byte address 0x4 - core index']
  #allocation1 [shape = 'u32[72,128]{1,0:T(1,128)}', space=vmem, size = 0x9000, scoped, tag = 'internal scratch']
  %s0 = inlined_call_operand.vmem [shape: bf16[128,32], index: 0, kind: input, shape index: {}]
  %s1 = inlined_call_operand.vmem [shape: bf16[32,32], index: 1, kind: input, shape index: {}]
  %s2 = inlined_call_operand.vmem [shape: f32[1,32], index: 2, kind: input, shape index: {}]
  %s3 = inlined_call_operand.vmem [shape: bf16[128,32], index: 3, kind: output, shape index: {}]
  %s4 = sld [smem:[#allocation0]]
  $region22: #{model_forward.3} parent=0
    _
  %s6 = ssub.s32 1, %s4
  %s7 = scalar_select 0, %s6, %s4
  // Predicated region
  $region2: #{model_forward.3} parent=0 // pred_check
    _
  $region3: #{model_forward.3} parent=0 // pred_check_branch
    %9 = sbr.rel (0) target = $region5
  $region4: #{model_forward.3} parent=0 // pred_region
    _
  $region5: #{model_forward.3} parent=0 // pred_fallthru
    _
  // Predicated region
  $region6: #{model_forward.3} parent=0 // pred_check
    _
  $region7: #{model_forward.3} parent=0 // pred_check_branch
    %11 = sbr.rel (0) target = $region9
  $region8: #{model_forward.3} parent=0 // pred_region
    _
  $region9: #{model_forward.3} parent=0 // pred_fallthru
    _
  // Predicated region
  $region10: #{model_forward.3} parent=0 // pred_check
    _
  $region11: #{model_forward.3} parent=0 // pred_check_branch
    %13 = sbr.rel (0) target = $region13
  $region12: #{model_forward.3} parent=0 // pred_region
    _
  $region13: #{model_forward.3} parent=0 // pred_fallthru
    _
  %v15 = vld [vmem:[%s0] sm:$0xf]
  %v16 = vld [vmem:[%s0 + $0x4] sm:$0xf]
  %v17 = vld [vmem:[%s0 + $0x8] sm:$0xf]
  %v18 = vld [vmem:[%s0 + $0xc] sm:$0xf]
  %v19 = vld [vmem:[%s0 + $0x10] sm:$0xf]
  %v20 = vld [vmem:[%s0 + $0x14] sm:$0xf]
  %v21 = vld [vmem:[%s0 + $0x18] sm:$0xf]
  %v22 = vld [vmem:[%s0 + $0x1c] sm:$0xf]
  %v23 = vld [vmem:[%s0 + $0x20] sm:$0xf]
  %v24 = vld [vmem:[%s0 + $0x24] sm:$0xf]
  %v25 = vld [vmem:[%s0 + $0x28] sm:$0xf]
  %v26 = vld [vmem:[%s0 + $0x2c] sm:$0xf]
  %v27 = vld [vmem:[%s0 + $0x30] sm:$0xf]
  %v28 = vld [vmem:[%s0 + $0x34] sm:$0xf]
  %v29 = vld [vmem:[%s0 + $0x38] sm:$0xf]
  %v30 = vld [vmem:[%s0 + $0x3c] sm:$0xf]
  %v31 = vld [vmem:[%s1] sm:$0xf]
  %v32 = vld [vmem:[%s1 + $0x4] sm:$0xf]
  %v33 = vld [vmem:[%s1 + $0x8] sm:$0xf]
  %v34 = vld [vmem:[%s1 + $0xc] sm:$0xf]
  %v35 = vld [vmem:[%s2] sm:$0x1]
  %v37 = vperm.slane %v35, 0
  %v55 = vunpack.c.l.b16 %v15
  %v56 = vunpack.c.l.b16 %v16
  %v57 = vunpack.c.l.b16 %v17
  %v58 = vunpack.c.l.b16 %v18
  %v59 = vunpack.c.l.b16 %v19
  %v60 = vunpack.c.l.b16 %v20
  %v61 = vunpack.c.l.b16 %v21
  %v62 = vunpack.c.l.b16 %v22
  %v63 = vunpack.c.l.b16 %v23
  %v64 = vunpack.c.l.b16 %v24
  %v65 = vunpack.c.l.b16 %v25
  %v66 = vunpack.c.l.b16 %v26
  %v67 = vunpack.c.l.b16 %v27
  %v68 = vunpack.c.l.b16 %v28
  %v69 = vunpack.c.l.b16 %v29
  %v70 = vunpack.c.l.b16 %v30
  %v71 = vpack.c.b16 %v56, %v55
  %v72 = vpack.c.b16 %v58, %v57
  %v73 = vpack.c.b16 %v60, %v59
  %v74 = vpack.c.b16 %v62, %v61
  %v75 = vpack.c.b16 %v64, %v63
  %v76 = vpack.c.b16 %v66, %v65
  %v77 = vpack.c.b16 %v68, %v67
  %v78 = vpack.c.b16 %v70, %v69
  %v83 = vunpack.c.l.b16 %v31
  %v84 = vunpack.c.l.b16 %v32
  %v85 = vunpack.c.l.b16 %v33
  %v86 = vunpack.c.l.b16 %v34
  %v87 = vpack.c.b16 %v84, %v83
  %v88 = vpack.c.b16 %v86, %v85
  %vm91 = vcmask 261120
  %v93 = vsel %vm91, %v71, 0
  %v96 = vsel %vm91, %v72, 0
  %v99 = vsel %vm91, %v73, 0
  %v102 = vsel %vm91, %v74, 0
  %v105 = vsel %vm91, %v75, 0
  %v108 = vsel %vm91, %v76, 0
  %v111 = vsel %vm91, %v77, 0
  %v114 = vsel %vm91, %v78, 0
  %116 = vmatpush.bf16.msra.mxu0 0
  %117 = vmatpush.bf16.msra.mxu0 0
  %118 = vmatpush.bf16.msra.mxu0 0
  %119 = vmatpush.bf16.msra.mxu0 0
  %120 = vmatpush.bf16.msra.mxu0 0
  %121 = vmatpush.bf16.msra.mxu0 0
  %122 = vmatpush.bf16.msra.mxu0 %v88
  %123 = vmatpush.bf16.msra.mxu0 %v87
  %124 = vmatmul.bf16.gmra.mxu0 %v93
  %v125 = vpop.f32.mrf.mxu0
  %v126 = vadd.f32 %v37, %v125
  %v127 = vpop.f32.mrf.mxu0
  %v128 = vadd.f32 %v37, %v127
  %129 = vmatmul.bf16.gmra.mxu0 %v96
  %v130 = vpop.f32.mrf.mxu0
  %v131 = vadd.f32 %v37, %v130
  %v132 = vpop.f32.mrf.mxu0
  %v133 = vadd.f32 %v37, %v132
  %134 = vmatmul.bf16.gmra.mxu0 %v99
  %v135 = vpop.f32.mrf.mxu0
  %v136 = vadd.f32 %v37, %v135
  %v137 = vpop.f32.mrf.mxu0
  %v138 = vadd.f32 %v37, %v137
  %139 = vmatmul.bf16.gmra.mxu0 %v102
  %v140 = vpop.f32.mrf.mxu0
  %v141 = vadd.f32 %v37, %v140
  %v142 = vpop.f32.mrf.mxu0
  %v143 = vadd.f32 %v37, %v142
  %144 = vmatmul.bf16.gmra.mxu0 %v105
  %v145 = vpop.f32.mrf.mxu0
  %v146 = vadd.f32 %v37, %v145
  %v147 = vpop.f32.mrf.mxu0
  %v148 = vadd.f32 %v37, %v147
  %149 = vmatmul.bf16.gmra.mxu0 %v108
  %v150 = vpop.f32.mrf.mxu0
  %v151 = vadd.f32 %v37, %v150
  %v152 = vpop.f32.mrf.mxu0
  %v153 = vadd.f32 %v37, %v152
  %154 = vmatmul.bf16.gmra.mxu0 %v111
  %v155 = vpop.f32.mrf.mxu0
  %v156 = vadd.f32 %v37, %v155
  %v157 = vpop.f32.mrf.mxu0
  %v158 = vadd.f32 %v37, %v157
  %159 = vmatmul.bf16.gmra.mxu0 %v114
  %v160 = vpop.f32.mrf.mxu0
  %v161 = vadd.f32 %v37, %v160
  %v162 = vpop.f32.mrf.mxu0
  %v163 = vadd.f32 %v37, %v162
  %164 = vdwg.mxu0
  %v165 = vpack.c.bf16 %v126, %v126
  %v166 = vpack.c.bf16 %v128, %v128
  %v167 = vpack.c.bf16 %v131, %v131
  %v168 = vpack.c.bf16 %v133, %v133
  %v169 = vpack.c.bf16 %v136, %v136
  %v170 = vpack.c.bf16 %v138, %v138
  %v171 = vpack.c.bf16 %v141, %v141
  %v172 = vpack.c.bf16 %v143, %v143
  %v173 = vpack.c.bf16 %v146, %v146
  %v174 = vpack.c.bf16 %v148, %v148
  %v175 = vpack.c.bf16 %v151, %v151
  %v176 = vpack.c.bf16 %v153, %v153
  %v177 = vpack.c.bf16 %v156, %v156
  %v178 = vpack.c.bf16 %v158, %v158
  %v179 = vpack.c.bf16 %v161, %v161
  %v180 = vpack.c.bf16 %v163, %v163
  %vm181 = vcmask 257024
  %182 = vst.msk [vmem:[%s3] sm:$0xf] %vm181, %v165
  %183 = vst.msk [vmem:[%s3 + $0x4] sm:$0xf] %vm181, %v166
  %184 = vst.msk [vmem:[%s3 + $0x8] sm:$0xf] %vm181, %v167
  %185 = vst.msk [vmem:[%s3 + $0xc] sm:$0xf] %vm181, %v168
  %186 = vst.msk [vmem:[%s3 + $0x10] sm:$0xf] %vm181, %v169
  %187 = vst.msk [vmem:[%s3 + $0x14] sm:$0xf] %vm181, %v170
  %188 = vst.msk [vmem:[%s3 + $0x18] sm:$0xf] %vm181, %v171
  %189 = vst.msk [vmem:[%s3 + $0x1c] sm:$0xf] %vm181, %v172
  %190 = vst.msk [vmem:[%s3 + $0x20] sm:$0xf] %vm181, %v173
  %191 = vst.msk [vmem:[%s3 + $0x24] sm:$0xf] %vm181, %v174
  %192 = vst.msk [vmem:[%s3 + $0x28] sm:$0xf] %vm181, %v175
  %193 = vst.msk [vmem:[%s3 + $0x2c] sm:$0xf] %vm181, %v176
  %194 = vst.msk [vmem:[%s3 + $0x30] sm:$0xf] %vm181, %v177
  %195 = vst.msk [vmem:[%s3 + $0x34] sm:$0xf] %vm181, %v178
  %196 = vst.msk [vmem:[%s3 + $0x38] sm:$0xf] %vm181, %v179
  %197 = vst.msk [vmem:[%s3 + $0x3c] sm:$0xf] %vm181, %v180
  // Predicated region
  $region14: #{model_forward.3} parent=0 // pred_check
    _
  $region15: #{model_forward.3} parent=0 // pred_check_branch
    %199 = sbr.rel (0) target = $region17
  $region16: #{model_forward.3} parent=0 // pred_region
    _
  $region17: #{model_forward.3} parent=0 // pred_fallthru
    _
  // Predicated region
  $region18: #{model_forward.3} parent=0 // pred_check
    _
  $region19: #{model_forward.3} parent=0 // pred_check_branch
    %201 = sbr.rel (0) target = $region21
  $region20: #{model_forward.3} parent=0 // pred_region
    _
  $region21: #{model_forward.3} parent=0 // pred_fallthru
    _

// kernel: model_forward.4
$region0: #{model_forward.4}
  #allocation0 [shape = 'u32[]', space=smem, size = 0x4, offset = 0x4, fixed_abs, tag = 'smem constant byte address 0x4 - core index']
  #allocation1 [shape = 'u32[72,128]{1,0:T(1,128)}', space=vmem, size = 0x9000, scoped, tag = 'internal scratch']
  %s0 = inlined_call_operand.vmem [shape: bf16[128,8], index: 0, kind: input, shape index: {}]
  %s1 = inlined_call_operand.vmem [shape: bf16[8,32], index: 1, kind: input, shape index: {}]
  %s2 = inlined_call_operand.vmem [shape: f32[1,32], index: 2, kind: input, shape index: {}]
  %s3 = inlined_call_operand.vmem [shape: bf16[128,32], index: 3, kind: output, shape index: {}]
  %s4 = sld [smem:[#allocation0]]
  $region22: #{model_forward.4} parent=0
    _
  %s6 = ssub.s32 1, %s4
  %s7 = scalar_select 0, %s6, %s4
  // Predicated region
  $region2: #{model_forward.4} parent=0 // pred_check
    _
  $region3: #{model_forward.4} parent=0 // pred_check_branch
    %9 = sbr.rel (0) target = $region5
  $region4: #{model_forward.4} parent=0 // pred_region
    _
  $region5: #{model_forward.4} parent=0 // pred_fallthru
    _
  // Predicated region
  $region6: #{model_forward.4} parent=0 // pred_check
    _
  $region7: #{model_forward.4} parent=0 // pred_check_branch
    %11 = sbr.rel (0) target = $region9
  $region8: #{model_forward.4} parent=0 // pred_region
    _
  $region9: #{model_forward.4} parent=0 // pred_fallthru
    _
  // Predicated region
  $region10: #{model_forward.4} parent=0 // pred_check
    _
  $region11: #{model_forward.4} parent=0 // pred_check_branch
    %13 = sbr.rel (0) target = $region13
  $region12: #{model_forward.4} parent=0 // pred_region
    _
  $region13: #{model_forward.4} parent=0 // pred_fallthru
    _
  %v15 = vld [vmem:[%s0] sm:$0xf]
  %v16 = vld [vmem:[%s0 + $0x4] sm:$0xf]
  %v17 = vld [vmem:[%s0 + $0x8] sm:$0xf]
  %v18 = vld [vmem:[%s0 + $0xc] sm:$0xf]
  %v19 = vld [vmem:[%s0 + $0x10] sm:$0xf]
  %v20 = vld [vmem:[%s0 + $0x14] sm:$0xf]
  %v21 = vld [vmem:[%s0 + $0x18] sm:$0xf]
  %v22 = vld [vmem:[%s0 + $0x1c] sm:$0xf]
  %v23 = vld [vmem:[%s0 + $0x20] sm:$0xf]
  %v24 = vld [vmem:[%s0 + $0x24] sm:$0xf]
  %v25 = vld [vmem:[%s0 + $0x28] sm:$0xf]
  %v26 = vld [vmem:[%s0 + $0x2c] sm:$0xf]
  %v27 = vld [vmem:[%s0 + $0x30] sm:$0xf]
  %v28 = vld [vmem:[%s0 + $0x34] sm:$0xf]
  %v29 = vld [vmem:[%s0 + $0x38] sm:$0xf]
  %v30 = vld [vmem:[%s0 + $0x3c] sm:$0xf]
  %v31 = vld [vmem:[%s1] sm:$0xf]
  %v32 = vld [vmem:[%s2] sm:$0x1]
  %v34 = vperm.slane %v32, 0
  %v52 = vunpack.c.l.b16 %v15
  %v53 = vunpack.c.l.b16 %v16
  %v54 = vunpack.c.l.b16 %v17
  %v55 = vunpack.c.l.b16 %v18
  %v56 = vunpack.c.l.b16 %v19
  %v57 = vunpack.c.l.b16 %v20
  %v58 = vunpack.c.l.b16 %v21
  %v59 = vunpack.c.l.b16 %v22
  %v60 = vunpack.c.l.b16 %v23
  %v61 = vunpack.c.l.b16 %v24
  %v62 = vunpack.c.l.b16 %v25
  %v63 = vunpack.c.l.b16 %v26
  %v64 = vunpack.c.l.b16 %v27
  %v65 = vunpack.c.l.b16 %v28
  %v66 = vunpack.c.l.b16 %v29
  %v67 = vunpack.c.l.b16 %v30
  %v68 = vpack.c.b16 %v53, %v52
  %v69 = vpack.c.b16 %v55, %v54
  %v70 = vpack.c.b16 %v57, %v56
  %v71 = vpack.c.b16 %v59, %v58
  %v72 = vpack.c.b16 %v61, %v60
  %v73 = vpack.c.b16 %v63, %v62
  %v74 = vpack.c.b16 %v65, %v64
  %v75 = vpack.c.b16 %v67, %v66
  %vm76 = vcmask 64512
  %v78 = vsel %vm76, %v68, 0
  %v81 = vsel %vm76, %v69, 0
  %v84 = vsel %vm76, %v70, 0
  %v87 = vsel %vm76, %v71, 0
  %v90 = vsel %vm76, %v72, 0
  %v93 = vsel %vm76, %v73, 0
  %v96 = vsel %vm76, %v74, 0
  %v99 = vsel %vm76, %v75, 0
  %vm101 = vcmask 1043456
  %v103 = vsel %vm101, %v31, 0
  %105 = vmatpush.bf16.msra.mxu0 0
  %106 = vmatpush.bf16.msra.mxu0 0
  %107 = vmatpush.bf16.msra.mxu0 0
  %108 = vmatpush.bf16.msra.mxu0 0
  %109 = vmatpush.bf16.msra.mxu0 0
  %110 = vmatpush.bf16.msra.mxu0 0
  %111 = vmatpush.bf16.msra.mxu0 0
  %112 = vmatpush.bf16.msra.mxu0 %v103
  %113 = vmatmul.bf16.gmra.mxu0 %v78
  %v114 = vpop.f32.mrf.mxu0
  %v115 = vadd.f32 %v34, %v114
  %v116 = vpop.f32.mrf.mxu0
  %v117 = vadd.f32 %v34, %v116
  %118 = vmatmul.bf16.gmra.mxu0 %v81
  %v119 = vpop.f32.mrf.mxu0
  %v120 = vadd.f32 %v34, %v119
  %v121 = vpop.f32.mrf.mxu0
  %v122 = vadd.f32 %v34, %v121
  %123 = vmatmul.bf16.gmra.mxu0 %v84
  %v124 = vpop.f32.mrf.mxu0
  %v125 = vadd.f32 %v34, %v124
  %v126 = vpop.f32.mrf.mxu0
  %v127 = vadd.f32 %v34, %v126
  %128 = vmatmul.bf16.gmra.mxu0 %v87
  %v129 = vpop.f32.mrf.mxu0
  %v130 = vadd.f32 %v34, %v129
  %v131 = vpop.f32.mrf.mxu0
  %v132 = vadd.f32 %v34, %v131
  %133 = vmatmul.bf16.gmra.mxu0 %v90
  %v134 = vpop.f32.mrf.mxu0
  %v135 = vadd.f32 %v34, %v134
  %v136 = vpop.f32.mrf.mxu0
  %v137 = vadd.f32 %v34, %v136
  %138 = vmatmul.bf16.gmra.mxu0 %v93
  %v139 = vpop.f32.mrf.mxu0
  %v140 = vadd.f32 %v34, %v139
  %v141 = vpop.f32.mrf.mxu0
  %v142 = vadd.f32 %v34, %v141
  %143 = vmatmul.bf16.gmra.mxu0 %v96
  %v144 = vpop.f32.mrf.mxu0
  %v145 = vadd.f32 %v34, %v144
  %v146 = vpop.f32.mrf.mxu0
  %v147 = vadd.f32 %v34, %v146
  %148 = vmatmul.bf16.gmra.mxu0 %v99
  %v149 = vpop.f32.mrf.mxu0
  %v150 = vadd.f32 %v34, %v149
  %v151 = vpop.f32.mrf.mxu0
  %v152 = vadd.f32 %v34, %v151
  %153 = vdwg.mxu0
  %v154 = vpack.c.bf16 %v115, %v115
  %v155 = vpack.c.bf16 %v117, %v117
  %v156 = vpack.c.bf16 %v120, %v120
  %v157 = vpack.c.bf16 %v122, %v122
  %v158 = vpack.c.bf16 %v125, %v125
  %v159 = vpack.c.bf16 %v127, %v127
  %v160 = vpack.c.bf16 %v130, %v130
  %v161 = vpack.c.bf16 %v132, %v132
  %v162 = vpack.c.bf16 %v135, %v135
  %v163 = vpack.c.bf16 %v137, %v137
  %v164 = vpack.c.bf16 %v140, %v140
  %v165 = vpack.c.bf16 %v142, %v142
  %v166 = vpack.c.bf16 %v145, %v145
  %v167 = vpack.c.bf16 %v147, %v147
  %v168 = vpack.c.bf16 %v150, %v150
  %v169 = vpack.c.bf16 %v152, %v152
  %vm170 = vcmask 257024
  %171 = vst.msk [vmem:[%s3] sm:$0xf] %vm170, %v154
  %172 = vst.msk [vmem:[%s3 + $0x4] sm:$0xf] %vm170, %v155
  %173 = vst.msk [vmem:[%s3 + $0x8] sm:$0xf] %vm170, %v156
  %174 = vst.msk [vmem:[%s3 + $0xc] sm:$0xf] %vm170, %v157
  %175 = vst.msk [vmem:[%s3 + $0x10] sm:$0xf] %vm170, %v158
  %176 = vst.msk [vmem:[%s3 + $0x14] sm:$0xf] %vm170, %v159
  %177 = vst.msk [vmem:[%s3 + $0x18] sm:$0xf] %vm170, %v160
  %178 = vst.msk [vmem:[%s3 + $0x1c] sm:$0xf] %vm170, %v161
  %179 = vst.msk [vmem:[%s3 + $0x20] sm:$0xf] %vm170, %v162
  %180 = vst.msk [vmem:[%s3 + $0x24] sm:$0xf] %vm170, %v163
  %181 = vst.msk [vmem:[%s3 + $0x28] sm:$0xf] %vm170, %v164
  %182 = vst.msk [vmem:[%s3 + $0x2c] sm:$0xf] %vm170, %v165
  %183 = vst.msk [vmem:[%s3 + $0x30] sm:$0xf] %vm170, %v166
  %184 = vst.msk [vmem:[%s3 + $0x34] sm:$0xf] %vm170, %v167
  %185 = vst.msk [vmem:[%s3 + $0x38] sm:$0xf] %vm170, %v168
  %186 = vst.msk [vmem:[%s3 + $0x3c] sm:$0xf] %vm170, %v169
  // Predicated region
  $region14: #{model_forward.4} parent=0 // pred_check
    _
  $region15: #{model_forward.4} parent=0 // pred_check_branch
    %188 = sbr.rel (0) target = $region17
  $region16: #{model_forward.4} parent=0 // pred_region
    _
  $region17: #{model_forward.4} parent=0 // pred_fallthru
    _
  // Predicated region
  $region18: #{model_forward.4} parent=0 // pred_check
    _
  $region19: #{model_forward.4} parent=0 // pred_check_branch
    %190 = sbr.rel (0) target = $region21
  $region20: #{model_forward.4} parent=0 // pred_region
    _
  $region21: #{model_forward.4} parent=0 // pred_fallthru
    _

// kernel: model_forward.5
$region0: #{model_forward.5}
  #allocation0 [shape = 'u32[]', space=smem, size = 0x4, offset = 0x4, fixed_abs, tag = 'smem constant byte address 0x4 - core index']
  #allocation1 [shape = 'u32[72,128]{1,0:T(1,128)}', space=vmem, size = 0x9000, scoped, tag = 'internal scratch']
  %s0 = inlined_call_operand.vmem [shape: bf16[512,72], index: 0, kind: input, shape index: {}]
  %s1 = inlined_call_operand.vmem [shape: bf16[72,32], index: 1, kind: input, shape index: {}]
  %s2 = inlined_call_operand.vmem [shape: f32[1,32], index: 2, kind: input, shape index: {}]
  %s3 = inlined_call_operand.vmem [shape: bf16[512,32], index: 3, kind: output, shape index: {}]
  %s4 = sld [smem:[#allocation0]]
  $region45: #{model_forward.5} parent=0
    _
  %s6 = ssub.s32 1, %s4
  %s7 = scalar_select 0, %s6, %s4
  loop: start=0, step=1, limit=4
  $region2: #{model_forward.5} parent=0 // loop_pre_header
    _
  $region3: #{model_forward.5} parent=0 // loop_header
    %s9 = sphi 0, %s13
    %p10 = scmp.ge.s32.totalorder %s9, 4
    %s16 = sphi 0, %s28
    %s17 = sphi 0, %s24
    %s18 = sphi 0, %s16
    %s19 = sphi 0, %s17
    %s20 = sphi 0, %s18
    %s21 = sphi 0, %s19
    %s31 = sphi 0, %s33
    %s34 = sphi 0, %s31
    %s35 = sphi 0, %s34
    %s51 = sphi 0, %s35
    %s57 = sphi 0, %s59
    %s60 = sphi 0, %s57
    %s61 = sphi 0, %s60
    %s77 = sphi 0, %s61
    %s83 = sphi 0, %s85
    %s86 = sphi 0, %s83
    %s87 = sphi 0, %s86
    %s103 = sphi 0, %s87
    %s111 = sphi 0, %s113
    %s114 = sphi 0, %s111
    %s115 = sphi 0, %s114
    %s131 = sphi 0, %s115
  $region4: #{model_forward.5} parent=0 // loop_header_branch
    %12 = sbr.rel (%p10) target = $region8
  $region5: #{model_forward.5} parent=0 // loop_body
    %s14 = ssub.s32 %s9, 1
    %s15 = ssub.s32 %s9, 2
    %s22 = sadd.s32 1, %s17
    %p23 = scmp.ge.s32.totalorder %s22, 1
    %s24 = scalar_select %p23, 0, %s22
    %s25 = sadd.s32 1, %s16
    %s26 = scalar_select %p23, %s25, %s16
    %p27 = scmp.ge.s32.totalorder %s26, 2
    %s28 = scalar_select %p27, 0, %s26
    %s29 = ssub.s32 %s16, %s28
    %p30 = scmp.eq.s32.totalorder %s29, 0
    %s32 = sadd.s32 %s31, 1
    %s33 = scalar_select %p30, %s31, %s32
    %p36 = pneg %p30
    %p37 = scmp.eq.s32.totalorder %s9, 1
    %p38 = por %p36, %p37
    %p39 = scmp.ne.s32.totalorder %s31, %s34
    %p40 = scmp.eq.s32.totalorder %s9, 0
    %p41 = por %p39, %p40
    %p42 = scmp.ne.s32.totalorder %s31, %s34
    %p43 = scmp.eq.s32.totalorder %s14, 1
    %p44 = por %p42, %p43
    %p45 = scmp.ne.s32.totalorder %s34, %s35
    %p46 = scmp.eq.s32.totalorder %s14, 0
    %p47 = por %p45, %p46
    %p48 = scmp.ne.s32.totalorder %s34, %s35
    %p49 = scmp.eq.s32.totalorder %s15, 1
    %p50 = por %p48, %p49
    %p52 = scmp.ne.s32.totalorder %s35, %s51
    %p53 = scmp.eq.s32.totalorder %s15, 0
    %p54 = por %p52, %p53
    %s55 = ssub.s32 %s17, %s24
    %p56 = scmp.eq.s32.totalorder %s55, 0
    %s58 = sadd.s32 %s57, 1
    %s59 = scalar_select %p56, %s57, %s58
    %p62 = pneg %p56
    %p63 = scmp.eq.s32.totalorder %s9, 1
    %p64 = por %p62, %p63
    %p65 = scmp.ne.s32.totalorder %s57, %s60
    %p66 = scmp.eq.s32.totalorder %s9, 0
    %p67 = por %p65, %p66
    %p68 = scmp.ne.s32.totalorder %s57, %s60
    %p69 = scmp.eq.s32.totalorder %s14, 1
    %p70 = por %p68, %p69
    %p71 = scmp.ne.s32.totalorder %s60, %s61
    %p72 = scmp.eq.s32.totalorder %s14, 0
    %p73 = por %p71, %p72
    %p74 = scmp.ne.s32.totalorder %s60, %s61
    %p75 = scmp.eq.s32.totalorder %s15, 1
    %p76 = por %p74, %p75
    %p78 = scmp.ne.s32.totalorder %s61, %s77
    %p79 = scmp.eq.s32.totalorder %s15, 0
    %p80 = por %p78, %p79
    %s81 = ssub.s32 %s17, %s24
    %p82 = scmp.eq.s32.totalorder %s81, 0
    %s84 = sadd.s32 %s83, 1
    %s85 = scalar_select %p82, %s83, %s84
    %p88 = pneg %p82
    %p89 = scmp.eq.s32.totalorder %s9, 1
    %p90 = por %p88, %p89
    %p91 = scmp.ne.s32.totalorder %s83, %s86
    %p92 = scmp.eq.s32.totalorder %s9, 0
    %p93 = por %p91, %p92
    %p94 = scmp.ne.s32.totalorder %s83, %s86
    %p95 = scmp.eq.s32.totalorder %s14, 1
    %p96 = por %p94, %p95
    %p97 = scmp.ne.s32.totalorder %s86, %s87
    %p98 = scmp.eq.s32.totalorder %s14, 0
    %p99 = por %p97, %p98
    %p100 = scmp.ne.s32.totalorder %s86, %s87
    %p101 = scmp.eq.s32.totalorder %s15, 1
    %p102 = por %p100, %p101
    %p104 = scmp.ne.s32.totalorder %s87, %s103
    %p105 = scmp.eq.s32.totalorder %s15, 0
    %p106 = por %p104, %p105
    %s107 = ssub.s32 %s16, %s28
    %s108 = ssub.s32 %s17, %s24
    %s109 = sor.u32 %s107, %s108
    %p110 = scmp.eq.s32.totalorder %s109, 0
    %s112 = sadd.s32 %s111, 1
    %s113 = scalar_select %p110, %s111, %s112
    %p116 = pneg %p110
    %p117 = scmp.eq.s32.totalorder %s9, 1
    %p118 = por %p116, %p117
    %p119 = scmp.ne.s32.totalorder %s111, %s114
    %p120 = scmp.eq.s32.totalorder %s9, 0
    %p121 = por %p119, %p120
    %p122 = scmp.ne.s32.totalorder %s111, %s114
    %p123 = scmp.eq.s32.totalorder %s14, 1
    %p124 = por %p122, %p123
    %p125 = scmp.ne.s32.totalorder %s114, %s115
    %p126 = scmp.eq.s32.totalorder %s14, 0
    %p127 = por %p125, %p126
    %p128 = scmp.ne.s32.totalorder %s114, %s115
    %p129 = scmp.eq.s32.totalorder %s15, 1
    %p130 = por %p128, %p129
    %p132 = scmp.ne.s32.totalorder %s115, %s131
    %p133 = scmp.eq.s32.totalorder %s15, 0
    %p134 = por %p132, %p133
    %p135 = scmp.le.s32.totalorder 1, %s9
    %p136 = scmp.lt.s32.totalorder %s9, 3
    %p137 = pnand %p135, %p136
    %p138 = pneg %p137
    // Predicated region
    $region9: #{model_forward.5} parent=5 // pred_check
      _
    $region10: #{model_forward.5} parent=5 // pred_check_branch
      %140 = sbr.rel (%p137) target = $region12
    $region11: #{model_forward.5} parent=5 // pred_region
      %s141 = ssub.s32 %s9, 1
      // Predicated region
      $region13: #{model_forward.5} parent=11 // pred_check
        %p142 = pneg %p73
      $region14: #{model_forward.5} parent=11 // pred_check_branch
        %144 = sbr.rel (%p142) target = $region16
      $region15: #{model_forward.5} parent=11 // pred_region
        %p145 = scmp.lt.s32.totalorder %s19, 0
        %s146 = scalar_select %p145, %s19, 0
        %s147 = smul.addr %s146, 4
        %s148 = scalar_lea.vmem %s1, %s147
      $region16: #{model_forward.5} parent=11 // pred_fallthru
        _
      // Predicated region
      $region17: #{model_forward.5} parent=11 // pred_check
        %p149 = pneg %p99
      $region18: #{model_forward.5} parent=11 // pred_check_branch
        %151 = sbr.rel (%p149) target = $region20
      $region19: #{model_forward.5} parent=11 // pred_region
        %p152 = scmp.lt.s32.totalorder %s19, 0
        %s153 = scalar_select %p152, %s19, 0
        %s154 = scalar_lea.vmem %s2, %s153
      $region20: #{model_forward.5} parent=11 // pred_fallthru
        _
    $region12: #{model_forward.5} parent=5 // pred_fallthru
      _
    %p155 = scmp.lt.s32.totalorder %s9, 2
    // Predicated region
    $region21: #{model_forward.5} parent=5 // pred_check
      %p156 = pneg %p155
    $region22: #{model_forward.5} parent=5 // pred_check_branch
      %158 = sbr.rel (%p156) target = $region24
    $region23: #{model_forward.5} parent=5 // pred_region
      // Predicated region
      $region25: #{model_forward.5} parent=23 // pred_check
        %p159 = pneg %p41
      $region26: #{model_forward.5} parent=23 // pred_check_branch
        %161 = sbr.rel (%p159) target = $region28
      $region27: #{model_forward.5} parent=23 // pred_region
        %s162 = smul.u32 32, %s16
        %p163 = scmp.lt.s32.totalorder %s162, 63
        %s164 = scalar_select %p163, %s162, 63
        %s165 = smul.addr %s164, 4
        %s166 = scalar_lea.vmem %s0, %s165
        %s167 = smul.u32 32, %s16
      $region28: #{model_forward.5} parent=23 // pred_fallthru
        _
    $region24: #{model_forward.5} parent=5 // pred_fallthru
      _
    %p168 = scmp.le.s32.totalorder 1, %s9
    %p169 = scmp.lt.s32.totalorder %s9, 3
    %p170 = pnand %p168, %p169
    %p171 = pneg %p170
    // Predicated region
    $region29: #{model_forward.5} parent=5 // pred_check
      _
    $region30: #{model_forward.5} parent=5 // pred_check_branch
      %173 = sbr.rel (%p170) target = $region32
    $region31: #{model_forward.5} parent=5 // pred_region
      %s174 = ssub.s32 %s9, 1
      %s175 = smul.u32 32, %s18
      %p176 = scmp.lt.s32.totalorder %s175, 63
      %s177 = scalar_select %p176, %s175, 63
      %s178 = smul.addr %s177, 4
      %s179 = scalar_lea.vmem %s0, %s178
      %p180 = pneg %p47
      %p181 = pneg %p44
      %p182 = scmp.lt.s32.totalorder %s19, 0
      %s183 = scalar_select %p182, %s19, 0
      %s184 = smul.addr %s183, 4
      %s185 = scalar_lea.vmem %s1, %s184
      %p186 = pneg %p73
      %p187 = pneg %p70
      %p188 = scmp.lt.s32.totalorder %s19, 0
      %s189 = scalar_select %p188, %s19, 0
      %s190 = scalar_lea.vmem %s2, %s189
      %p191 = pneg %p99
      %p192 = pneg %p96
      %p193 = pneg %p127
      %p194 = pneg %p124
      %s195 = smul.u32 32, %s18
      %p196 = scmp.lt.s32.totalorder %s195, 63
      %s197 = scalar_select %p196, %s195, 63
      %p198 = scmp.lt.s32.totalorder %s19, 0
      %s199 = scalar_select %p198, %s19, 0
      %s200 = sadd.s32 %s199, %s197
      %s201 = smul.addr %s200, 4
      %s202 = scalar_lea.vmem %s3, %s201
      %s203 = smul.u32 32, %s18
      %p204 = scmp.lt.s32.totalorder %s203, 63
      %s205 = scalar_select %p204, %s203, 63
      %s206 = smul.addr %s205, 4
      %s207 = scalar_lea.vmem %s0, %s206
      %s208 = smul.u32 32, %s18
      %p209 = scmp.lt.s32.totalorder %s19, 0
      %s210 = scalar_select %p209, %s19, 0
      %s211 = smul.addr %s210, 4
      %s212 = scalar_lea.vmem %s1, %s211
      %p213 = scmp.lt.s32.totalorder %s19, 0
      %s214 = scalar_select %p213, %s19, 0
      %s215 = scalar_lea.vmem %s2, %s214
      %s216 = smul.u32 32, %s18
      %p217 = scmp.lt.s32.totalorder %s216, 63
      %s218 = scalar_select %p217, %s216, 63
      %p219 = scmp.lt.s32.totalorder %s19, 0
      %s220 = scalar_select %p219, %s19, 0
      %s221 = sadd.s32 %s220, %s218
      %s222 = smul.addr %s221, 4
      %s223 = scalar_lea.vmem %s3, %s222
      %s224 = smul.u32 32, %s18
      %v226 = vld [vmem:[%s207] sm:$0xf]
      %v227 = vld [vmem:[%s207 + $0x4] sm:$0xf]
      %v228 = vld [vmem:[%s207 + $0x8] sm:$0xf]
      %v229 = vld [vmem:[%s207 + $0xc] sm:$0xf]
      %v230 = vld [vmem:[%s207 + $0x10] sm:$0xf]
      %v231 = vld [vmem:[%s207 + $0x14] sm:$0xf]
      %v232 = vld [vmem:[%s207 + $0x18] sm:$0xf]
      %v233 = vld [vmem:[%s207 + $0x1c] sm:$0xf]
      %v234 = vld [vmem:[%s207 + $0x20] sm:$0xf]
      %v235 = vld [vmem:[%s207 + $0x24] sm:$0xf]
      %v236 = vld [vmem:[%s207 + $0x28] sm:$0xf]
      %v237 = vld [vmem:[%s207 + $0x2c] sm:$0xf]
      %v238 = vld [vmem:[%s207 + $0x30] sm:$0xf]
      %v239 = vld [vmem:[%s207 + $0x34] sm:$0xf]
      %v240 = vld [vmem:[%s207 + $0x38] sm:$0xf]
      %v241 = vld [vmem:[%s207 + $0x3c] sm:$0xf]
      %v242 = vld [vmem:[%s207 + $0x40] sm:$0xf]
      %v243 = vld [vmem:[%s207 + $0x44] sm:$0xf]
      %v244 = vld [vmem:[%s207 + $0x48] sm:$0xf]
      %v245 = vld [vmem:[%s207 + $0x4c] sm:$0xf]
      %v246 = vld [vmem:[%s207 + $0x50] sm:$0xf]
      %v247 = vld [vmem:[%s207 + $0x54] sm:$0xf]
      %v248 = vld [vmem:[%s207 + $0x58] sm:$0xf]
      %v249 = vld [vmem:[%s207 + $0x5c] sm:$0xf]
      %v250 = vld [vmem:[%s207 + $0x60] sm:$0xf]
      %v251 = vld [vmem:[%s207 + $0x64] sm:$0xf]
      %v252 = vld [vmem:[%s207 + $0x68] sm:$0xf]
      %v253 = vld [vmem:[%s207 + $0x6c] sm:$0xf]
      %v254 = vld [vmem:[%s207 + $0x70] sm:$0xf]
      %v255 = vld [vmem:[%s207 + $0x74] sm:$0xf]
      %v256 = vld [vmem:[%s207 + $0x78] sm:$0xf]
      %v257 = vld [vmem:[%s207 + $0x7c] sm:$0xf]
      %v258 = vld [vmem:[%s212] sm:$0xf]
      %v259 = vld [vmem:[%s212 + $0x4] sm:$0xf]
      %v260 = vld [vmem:[%s212 + $0x8] sm:$0xf]
      %v261 = vld [vmem:[%s212 + $0xc] sm:$0xf]
      %v262 = vld [vmem:[%s212 + $0x10] sm:$0xf]
      %v263 = vld [vmem:[%s212 + $0x14] sm:$0xf]
      %v264 = vld [vmem:[%s212 + $0x18] sm:$0xf]
      %v265 = vld [vmem:[%s212 + $0x1c] sm:$0xf]
      %v266 = vld [vmem:[%s212 + $0x20] sm:$0xf]
      %v267 = vld [vmem:[%s215] sm:$0x1]
      %v269 = vperm.slane %v267, 0
      %v303 = vunpack.c.l.b16 %v226
      %v304 = vunpack.c.l.b16 %v227
      %v305 = vunpack.c.l.b16 %v228
      %v306 = vunpack.c.l.b16 %v229
      %v307 = vunpack.c.l.b16 %v230
      %v308 = vunpack.c.l.b16 %v231
      %v309 = vunpack.c.l.b16 %v232
      %v310 = vunpack.c.l.b16 %v233
      %v311 = vunpack.c.l.b16 %v234
      %v312 = vunpack.c.l.b16 %v235
      %v313 = vunpack.c.l.b16 %v236
      %v314 = vunpack.c.l.b16 %v237
      %v315 = vunpack.c.l.b16 %v238
      %v316 = vunpack.c.l.b16 %v239
      %v317 = vunpack.c.l.b16 %v240
      %v318 = vunpack.c.l.b16 %v241
      %v319 = vunpack.c.l.b16 %v242
      %v320 = vunpack.c.l.b16 %v243
      %v321 = vunpack.c.l.b16 %v244
      %v322 = vunpack.c.l.b16 %v245
      %v323 = vunpack.c.l.b16 %v246
      %v324 = vunpack.c.l.b16 %v247
      %v325 = vunpack.c.l.b16 %v248
      %v326 = vunpack.c.l.b16 %v249
      %v327 = vunpack.c.l.b16 %v250
      %v328 = vunpack.c.l.b16 %v251
      %v329 = vunpack.c.l.b16 %v252
      %v330 = vunpack.c.l.b16 %v253
      %v331 = vunpack.c.l.b16 %v254
      %v332 = vunpack.c.l.b16 %v255
      %v333 = vunpack.c.l.b16 %v256
      %v334 = vunpack.c.l.b16 %v257
      %v335 = vpack.c.b16 %v304, %v303
      %v336 = vpack.c.b16 %v306, %v305
      %v337 = vpack.c.b16 %v308, %v307
      %v338 = vpack.c.b16 %v310, %v309
      %v339 = vpack.c.b16 %v312, %v311
      %v340 = vpack.c.b16 %v314, %v313
      %v341 = vpack.c.b16 %v316, %v315
      %v342 = vpack.c.b16 %v318, %v317
      %v343 = vpack.c.b16 %v320, %v319
      %v344 = vpack.c.b16 %v322, %v321
      %v345 = vpack.c.b16 %v324, %v323
      %v346 = vpack.c.b16 %v326, %v325
      %v347 = vpack.c.b16 %v328, %v327
      %v348 = vpack.c.b16 %v330, %v329
      %v349 = vpack.c.b16 %v332, %v331
      %v350 = vpack.c.b16 %v334, %v333
      %v360 = vunpack.c.l.b16 %v258
      %v361 = vunpack.c.l.b16 %v259
      %v362 = vunpack.c.l.b16 %v260
      %v363 = vunpack.c.l.b16 %v261
      %v364 = vunpack.c.l.b16 %v262
      %v365 = vunpack.c.l.b16 %v263
      %v366 = vunpack.c.l.b16 %v264
      %v367 = vunpack.c.l.b16 %v265
      %v368 = vunpack.c.l.b16 %v266
      %v369 = vpack.c.b16 %v361, %v360
      %v370 = vpack.c.b16 %v363, %v362
      %v371 = vpack.c.b16 %v365, %v364
      %v372 = vpack.c.b16 %v367, %v366
      %v373 = vpack.c.b16 %v368, %v368
      %vm378 = vcmask 588800
      %v380 = vsel %vm378, %v335, 0
      %v383 = vsel %vm378, %v336, 0
      %v386 = vsel %vm378, %v337, 0
      %v389 = vsel %vm378, %v338, 0
      %v392 = vsel %vm378, %v339, 0
      %v395 = vsel %vm378, %v340, 0
      %v398 = vsel %vm378, %v341, 0
      %v401 = vsel %vm378, %v342, 0
      %v404 = vsel %vm378, %v343, 0
      %v407 = vsel %vm378, %v344, 0
      %v410 = vsel %vm378, %v345, 0
      %v413 = vsel %vm378, %v346, 0
      %v416 = vsel %vm378, %v347, 0
      %v419 = vsel %vm378, %v348, 0
      %v422 = vsel %vm378, %v349, 0
      %v425 = vsel %vm378, %v350, 0
      %vm427 = vcmask 1043456
      %v429 = vsel %vm427, %v373, 0
      %431 = vmatpush.bf16.msra.mxu0 0
      %432 = vmatpush.bf16.msra.mxu0 0
      %433 = vmatpush.bf16.msra.mxu0 0
      %434 = vmatpush.bf16.msra.mxu0 %v429
      %435 = vmatpush.bf16.msra.mxu0 %v372
      %436 = vmatpush.bf16.msra.mxu0 %v371
      %437 = vmatpush.bf16.msra.mxu0 %v370
      %438 = vmatpush.bf16.msra.mxu0 %v369
      %439 = vmatmul.bf16.gmra.mxu0 %v380
      %v440 = vpop.f32.mrf.mxu0
      %v441 = vadd.f32 %v269, %v440
      %v442 = vpop.f32.mrf.mxu0
      %v443 = vadd.f32 %v269, %v442
      %444 = vmatmul.bf16.gmra.mxu0 %v383
      %v445 = vpop.f32.mrf.mxu0
      %v446 = vadd.f32 %v269, %v445
      %v447 = vpop.f32.mrf.mxu0
      %v448 = vadd.f32 %v269, %v447
      %449 = vmatmul.bf16.gmra.mxu0 %v386
      %v450 = vpop.f32.mrf.mxu0
      %v451 = vadd.f32 %v269, %v450
      %v452 = vpop.f32.mrf.mxu0
      %v453 = vadd.f32 %v269, %v452
      %454 = vmatmul.bf16.gmra.mxu0 %v389
      %v455 = vpop.f32.mrf.mxu0
      %v456 = vadd.f32 %v269, %v455
      %v457 = vpop.f32.mrf.mxu0
      %v458 = vadd.f32 %v269, %v457
      %459 = vmatmul.bf16.gmra.mxu0 %v392
      %v460 = vpop.f32.mrf.mxu0
      %v461 = vadd.f32 %v269, %v460
      %v462 = vpop.f32.mrf.mxu0
      %v463 = vadd.f32 %v269, %v462
      %464 = vmatmul.bf16.gmra.mxu0 %v395
      %v465 = vpop.f32.mrf.mxu0
      %v466 = vadd.f32 %v269, %v465
      %v467 = vpop.f32.mrf.mxu0
      %v468 = vadd.f32 %v269, %v467
      %469 = vmatmul.bf16.gmra.mxu0 %v398
      %v470 = vpop.f32.mrf.mxu0
      %v471 = vadd.f32 %v269, %v470
      %v472 = vpop.f32.mrf.mxu0
      %v473 = vadd.f32 %v269, %v472
      %474 = vmatmul.bf16.gmra.mxu0 %v401
      %v475 = vpop.f32.mrf.mxu0
      %v476 = vadd.f32 %v269, %v475
      %v477 = vpop.f32.mrf.mxu0
      %v478 = vadd.f32 %v269, %v477
      %479 = vmatmul.bf16.gmra.mxu0 %v404
      %v480 = vpop.f32.mrf.mxu0
      %v481 = vadd.f32 %v269, %v480
      %v482 = vpop.f32.mrf.mxu0
      %v483 = vadd.f32 %v269, %v482
      %484 = vmatmul.bf16.gmra.mxu0 %v407
      %v485 = vpop.f32.mrf.mxu0
      %v486 = vadd.f32 %v269, %v485
      %v487 = vpop.f32.mrf.mxu0
      %v488 = vadd.f32 %v269, %v487
      %489 = vmatmul.bf16.gmra.mxu0 %v410
      %v490 = vpop.f32.mrf.mxu0
      %v491 = vadd.f32 %v269, %v490
      %v492 = vpop.f32.mrf.mxu0
      %v493 = vadd.f32 %v269, %v492
      %494 = vmatmul.bf16.gmra.mxu0 %v413
      %v495 = vpop.f32.mrf.mxu0
      %v496 = vadd.f32 %v269, %v495
      %v497 = vpop.f32.mrf.mxu0
      %v498 = vadd.f32 %v269, %v497
      %499 = vmatmul.bf16.gmra.mxu0 %v416
      %v500 = vpop.f32.mrf.mxu0
      %v501 = vadd.f32 %v269, %v500
      %v502 = vpop.f32.mrf.mxu0
      %v503 = vadd.f32 %v269, %v502
      %504 = vmatmul.bf16.gmra.mxu0 %v419
      %v505 = vpop.f32.mrf.mxu0
      %v506 = vadd.f32 %v269, %v505
      %v507 = vpop.f32.mrf.mxu0
      %v508 = vadd.f32 %v269, %v507
      %509 = vmatmul.bf16.gmra.mxu0 %v422
      %v510 = vpop.f32.mrf.mxu0
      %v511 = vadd.f32 %v269, %v510
      %v512 = vpop.f32.mrf.mxu0
      %v513 = vadd.f32 %v269, %v512
      %514 = vmatmul.bf16.gmra.mxu0 %v425
      %v515 = vpop.f32.mrf.mxu0
      %v516 = vadd.f32 %v269, %v515
      %v517 = vpop.f32.mrf.mxu0
      %v518 = vadd.f32 %v269, %v517
      %519 = vdwg.mxu0
      %v520 = vpack.c.bf16 %v441, %v441
      %v521 = vpack.c.bf16 %v443, %v443
      %v522 = vpack.c.bf16 %v446, %v446
      %v523 = vpack.c.bf16 %v448, %v448
      %v524 = vpack.c.bf16 %v451, %v451
      %v525 = vpack.c.bf16 %v453, %v453
      %v526 = vpack.c.bf16 %v456, %v456
      %v527 = vpack.c.bf16 %v458, %v458
      %v528 = vpack.c.bf16 %v461, %v461
      %v529 = vpack.c.bf16 %v463, %v463
      %v530 = vpack.c.bf16 %v466, %v466
      %v531 = vpack.c.bf16 %v468, %v468
      %v532 = vpack.c.bf16 %v471, %v471
      %v533 = vpack.c.bf16 %v473, %v473
      %v534 = vpack.c.bf16 %v476, %v476
      %v535 = vpack.c.bf16 %v478, %v478
      %v536 = vpack.c.bf16 %v481, %v481
      %v537 = vpack.c.bf16 %v483, %v483
      %v538 = vpack.c.bf16 %v486, %v486
      %v539 = vpack.c.bf16 %v488, %v488
      %v540 = vpack.c.bf16 %v491, %v491
      %v541 = vpack.c.bf16 %v493, %v493
      %v542 = vpack.c.bf16 %v496, %v496
      %v543 = vpack.c.bf16 %v498, %v498
      %v544 = vpack.c.bf16 %v501, %v501
      %v545 = vpack.c.bf16 %v503, %v503
      %v546 = vpack.c.bf16 %v506, %v506
      %v547 = vpack.c.bf16 %v508, %v508
      %v548 = vpack.c.bf16 %v511, %v511
      %v549 = vpack.c.bf16 %v513, %v513
      %v550 = vpack.c.bf16 %v516, %v516
      %v551 = vpack.c.bf16 %v518, %v518
      %vm552 = vcmask 257024
      %553 = vst.msk [vmem:[%s223] sm:$0xf] %vm552, %v520
      %554 = vst.msk [vmem:[%s223 + $0x4] sm:$0xf] %vm552, %v521
      %555 = vst.msk [vmem:[%s223 + $0x8] sm:$0xf] %vm552, %v522
      %556 = vst.msk [vmem:[%s223 + $0xc] sm:$0xf] %vm552, %v523
      %557 = vst.msk [vmem:[%s223 + $0x10] sm:$0xf] %vm552, %v524
      %558 = vst.msk [vmem:[%s223 + $0x14] sm:$0xf] %vm552, %v525
      %559 = vst.msk [vmem:[%s223 + $0x18] sm:$0xf] %vm552, %v526
      %560 = vst.msk [vmem:[%s223 + $0x1c] sm:$0xf] %vm552, %v527
      %561 = vst.msk [vmem:[%s223 + $0x20] sm:$0xf] %vm552, %v528
      %562 = vst.msk [vmem:[%s223 + $0x24] sm:$0xf] %vm552, %v529
      %563 = vst.msk [vmem:[%s223 + $0x28] sm:$0xf] %vm552, %v530
      %564 = vst.msk [vmem:[%s223 + $0x2c] sm:$0xf] %vm552, %v531
      %565 = vst.msk [vmem:[%s223 + $0x30] sm:$0xf] %vm552, %v532
      %566 = vst.msk [vmem:[%s223 + $0x34] sm:$0xf] %vm552, %v533
      %567 = vst.msk [vmem:[%s223 + $0x38] sm:$0xf] %vm552, %v534
      %568 = vst.msk [vmem:[%s223 + $0x3c] sm:$0xf] %vm552, %v535
      %569 = vst.msk [vmem:[%s223 + $0x40] sm:$0xf] %vm552, %v536
      %570 = vst.msk [vmem:[%s223 + $0x44] sm:$0xf] %vm552, %v537
      %571 = vst.msk [vmem:[%s223 + $0x48] sm:$0xf] %vm552, %v538
      %572 = vst.msk [vmem:[%s223 + $0x4c] sm:$0xf] %vm552, %v539
      %573 = vst.msk [vmem:[%s223 + $0x50] sm:$0xf] %vm552, %v540
      %574 = vst.msk [vmem:[%s223 + $0x54] sm:$0xf] %vm552, %v541
      %575 = vst.msk [vmem:[%s223 + $0x58] sm:$0xf] %vm552, %v542
      %576 = vst.msk [vmem:[%s223 + $0x5c] sm:$0xf] %vm552, %v543
      %577 = vst.msk [vmem:[%s223 + $0x60] sm:$0xf] %vm552, %v544
      %578 = vst.msk [vmem:[%s223 + $0x64] sm:$0xf] %vm552, %v545
      %579 = vst.msk [vmem:[%s223 + $0x68] sm:$0xf] %vm552, %v546
      %580 = vst.msk [vmem:[%s223 + $0x6c] sm:$0xf] %vm552, %v547
      %581 = vst.msk [vmem:[%s223 + $0x70] sm:$0xf] %vm552, %v548
      %582 = vst.msk [vmem:[%s223 + $0x74] sm:$0xf] %vm552, %v549
      %583 = vst.msk [vmem:[%s223 + $0x78] sm:$0xf] %vm552, %v550
      %584 = vst.msk [vmem:[%s223 + $0x7c] sm:$0xf] %vm552, %v551
      %s585 = smul.u32 32, %s18
      %p586 = scmp.lt.s32.totalorder %s585, 63
      %s587 = scalar_select %p586, %s585, 63
      %p588 = scmp.lt.s32.totalorder %s19, 0
      %s589 = scalar_select %p588, %s19, 0
      %s590 = sadd.s32 %s589, %s587
      %s591 = smul.addr %s590, 4
      %s592 = scalar_lea.vmem %s3, %s591
      // Predicated region
      $region33: #{model_forward.5} parent=31 // pred_check
        %p593 = pneg %p124
      $region34: #{model_forward.5} parent=31 // pred_check_branch
        %595 = sbr.rel (%p593) target = $region36
      $region35: #{model_forward.5} parent=31 // pred_region
        %s596 = smul.u32 32, %s18
      $region36: #{model_forward.5} parent=31 // pred_fallthru
        _
    $region32: #{model_forward.5} parent=5 // pred_fallthru
      _
    %p597 = scmp.le.s32.totalorder 2, %s9
    // Predicated region
    $region37: #{model_forward.5} parent=5 // pred_check
      %p598 = pneg %p597
    $region38: #{model_forward.5} parent=5 // pred_check_branch
      %600 = sbr.rel (%p598) target = $region40
    $region39: #{model_forward.5} parent=5 // pred_region
      %s601 = ssub.s32 %s9, 2
      // Predicated region
      $region41: #{model_forward.5} parent=39 // pred_check
        %p602 = pneg %p130
      $region42: #{model_forward.5} parent=39 // pred_check_branch
        %604 = sbr.rel (%p602) target = $region44
      $region43: #{model_forward.5} parent=39 // pred_region
        %s605 = smul.u32 32, %s20
        %p606 = scmp.lt.s32.totalorder %s605, 63
        %s607 = scalar_select %p606, %s605, 63
        %p608 = scmp.lt.s32.totalorder %s21, 0
        %s609 = scalar_select %p608, %s21, 0
        %s610 = sadd.s32 %s609, %s607
        %s611 = smul.addr %s610, 4
        %s612 = scalar_lea.vmem %s3, %s611
      $region44: #{model_forward.5} parent=39 // pred_fallthru
        _
    $region40: #{model_forward.5} parent=5 // pred_fallthru
      _
  $region6: #{model_forward.5} parent=0 // loop_footer
    %s13 = sadd.s32 1, %s9
  $region7: #{model_forward.5} parent=0 // loop_footer_branch
    %8 = sbr.rel target = $region3
  $region8: #{model_forward.5} parent=0 // loop_exit
    _

</llo_original>
